<compile_context>
chip_gen: v5e
topology: v5e:2x2
jax: 0.10.0
libtpu: 0.0.40
codegen_flags: <defaults>
</compile_context>

<pallas_src>
import functools
import math

import jax
import jax.numpy as jnp
from jax.experimental import pallas as pl
from jax.experimental.pallas import tpu as pltpu

# ---------------- model hyper-parameters (from ModelArgs defaults) ----------------
DIM = 256
N_HEADS = 4
WORLD_SIZE = 4
N_LOCAL_HEADS = N_HEADS // WORLD_SIZE          # = 1
KV_LORA_RANK = 64
QK_NOPE = 32
QK_ROPE = 16
QK_HEAD_DIM = QK_NOPE + QK_ROPE                # 48
V_HEAD_DIM = 32
ROPE_THETA = 10000.0
SOFTMAX_SCALE = QK_HEAD_DIM ** (-0.5)
RMS_EPS = 1e-6
NEG_INF = -1e30

# fused projection column layout (width 192); lane-group aligned:
#   vreg group 0 (lanes 0..127):  [q_nope|q_pe](48) | [0|rot(q_pe)](48) | k_pe(16) | rot(k_pe)(16)
#   vreg group 1 (lanes 128..191): kv latent (64)
OFF_Q = 0                                      # [0, 48)    scaled [q_nope | q_pe]
OFF_QROT = OFF_Q + QK_HEAD_DIM                 # [48, 96)   scaled [zeros(32) | rot(q_pe)]
OFF_KPE = OFF_QROT + QK_HEAD_DIM               # [96, 112)  k_pe
OFF_KROT = OFF_KPE + QK_ROPE                   # [112, 128) rot(k_pe)
OFF_KVLAT = OFF_KROT + QK_ROPE                 # [128, 192) kv latent
FUSED_OUT = OFF_KVLAT + KV_LORA_RANK           # 192


# ------------------------------- Pallas kernel -------------------------------------
def mla_kernel(x_ref, wf_ref, wkvb_ref, wo_ref,
               cosq_ref, sinq_ref, cosk_ref, sink_ref, o_ref, *, eps):
    """One grid step = one batch element (S rows).  Single local head."""
    bf16 = jnp.bfloat16
    f32 = jnp.float32

    x = x_ref[...]                                                    # (S, D) bf16

    # ---- fused q + kv_a projection (single lane-dense MXU matmul, RHS pre-transposed) ----
    proj = jnp.dot(x, wf_ref[...], preferred_element_type=f32)        # (S, 192) f32

    # ---- RoPE (pair-swap/sign folded into weight columns -> pure VPU elementwise) ----
    # q is one contiguous 48-lane slice at offset 0; softmax scale already folded in.
    q = (proj[:, OFF_Q:OFF_Q + QK_HEAD_DIM] * cosq_ref[...]
         + proj[:, OFF_QROT:OFF_QROT + QK_HEAD_DIM] * sinq_ref[...])  # (S, 48)
    k_pe = (proj[:, OFF_KPE:OFF_KPE + QK_ROPE] * cosk_ref[...]
            + proj[:, OFF_KROT:OFF_KROT + QK_ROPE] * sink_ref[...])   # (S, 16)

    kv_lat = proj[:, OFF_KVLAT:OFF_KVLAT + KV_LORA_RANK]              # (S, 64)

    # ---- RMSNorm on latent kv (gain folded into wkvb at prep time) ----
    ms = jnp.mean(kv_lat * kv_lat, axis=-1, keepdims=True)
    kv_n = kv_lat * jax.lax.rsqrt(ms + eps)                           # (S, 64)

    # ---- kv_b projection ----
    kvb = jnp.dot(kv_n.astype(bf16), wkvb_ref[...],
                  preferred_element_type=f32)                         # (S, 64)
    k_nope = kvb[:, :QK_NOPE]                                         # (S, 32)
    v = kvb[:, QK_NOPE:QK_NOPE + V_HEAD_DIM]                          # (S, 32)

    # ---- fused K=48 score matmul; contract last dims of both operands (no .T) ----
    k = jnp.concatenate([k_nope, k_pe], axis=-1)                      # (S, 48)
    scores = jax.lax.dot_general(
        q.astype(bf16), k.astype(bf16),
        dimension_numbers=(((1,), (1,)), ((), ())),
        preferred_element_type=f32)                                   # (S, S), scale folded

    # ---- plain causal mask for this batch tile, generated in-register ----
    s = scores.shape[0]
    row = jax.lax.broadcasted_iota(jnp.int32, (s, s), 0)
    col = jax.lax.broadcasted_iota(jnp.int32, (s, s), 1)
    scores = jnp.where(col <= row, scores, NEG_INF)

    # ---- softmax (f32, exact reciprocal) ----
    scores = scores - jnp.max(scores, axis=-1, keepdims=True)
    p = jnp.exp(scores)
    attn = p * pl.reciprocal(jnp.sum(p, axis=-1, keepdims=True), approx=False)

    out_h = jnp.dot(attn.astype(bf16), v.astype(bf16),
                    preferred_element_type=f32)                       # (S, 32)

    # ---- output projection (RowParallelLinear local partial, RHS pre-transposed) ----
    # TODO(synk): dist.all_reduce of this partial across world_size ranks is omitted.
    o_ref[...] = jnp.dot(out_h.astype(bf16), wo_ref[...],
                         preferred_element_type=f32).astype(o_ref.dtype)   # (S, 256) bf16


# --------------------------- one-time weight / table prep ---------------------------
def _pair_swap_neg(w):
    """Rows (re0, im0, re1, im1, ...) -> (-im0, re0, -im1, re1, ...) of the weight."""
    m, k = w.shape
    w2 = w.reshape(m // 2, 2, k)
    return jnp.stack([-w2[:, 1, :], w2[:, 0, :]], axis=1).reshape(m, k)


def prepare_mla_params(wq, wkva, kvnorm, wkvb, wo):
    """Fuse/fold/transpose/cast all weights once (hoisted out of the per-call path)."""
    wq_nope = wq[:QK_NOPE]                      # (32, 256)
    wq_pe = wq[QK_NOPE:]                        # (16, 256)
    wkv_lat = wkva[:KV_LORA_RANK]               # (64, 256)
    wk_pe = wkva[KV_LORA_RANK:]                 # (16, 256)
    zeros32 = jnp.zeros((QK_NOPE, DIM), wq.dtype)

    w_fused = jnp.concatenate([
        SOFTMAX_SCALE * wq_nope,                # cols [0, 32)
        SOFTMAX_SCALE * wq_pe,                  # cols [32, 48)
        zeros32,                                # cols [48, 80)
        SOFTMAX_SCALE * _pair_swap_neg(wq_pe),  # cols [80, 96)
        wk_pe,                                  # cols [96, 112)
        _pair_swap_neg(wk_pe),                  # cols [112, 128)
        wkv_lat,                                # cols [128, 192)
    ], axis=0)                                  # (192, 256)

    wf_t = w_fused.T.astype(jnp.bfloat16)                              # (256, 192)
    # Fold RMSNorm gain (per-input-feature) into the kv_b weight.
    wkvb_t = (wkvb * kvnorm.reshape(1, -1)).T.astype(jnp.bfloat16)     # (64, 64)
    wo_t = wo.T.astype(jnp.bfloat16)                                   # (32, 256)
    return wf_t, wkvb_t, wo_t


def make_rope_tables(seq_len):
    """cos/sin tables, expanded so RoPE is a pure elementwise op on contiguous slices."""
    inv_freq = 1.0 / (ROPE_THETA ** (jnp.arange(0, QK_ROPE, 2, dtype=jnp.float32) / QK_ROPE))
    ang = jnp.arange(seq_len, dtype=jnp.float32)[:, None] * inv_freq[None, :]   # (S, 8)
    cos = jnp.repeat(jnp.cos(ang), 2, axis=-1)                                  # (S, 16)
    sin = jnp.repeat(jnp.sin(ang), 2, axis=-1)                                  # (S, 16)
    ones = jnp.ones((seq_len, QK_NOPE), jnp.float32)
    zeros = jnp.zeros((seq_len, QK_NOPE), jnp.float32)
    cos_q = jnp.concatenate([ones, cos], axis=-1)                               # (S, 48)
    sin_q = jnp.concatenate([zeros, sin], axis=-1)                              # (S, 48)
    return cos_q, sin_q, cos, sin


# ------------------------------- forward wrapper ------------------------------------
@functools.partial(jax.jit, static_argnames=())
def mla_forward(x, params, rope):
    wf_t, wkvb_t, wo_t = params
    cos_q, sin_q, cos_k, sin_k = rope
    B, S, D = x.shape
    x2 = x.reshape(B * S, D).astype(jnp.bfloat16)

    kernel = functools.partial(mla_kernel, eps=RMS_EPS)

    def full_spec(a):
        return pl.BlockSpec(a.shape, lambda b, _nd=a.ndim: (0,) * _nd)

    out = pl.pallas_call(
        kernel,
        out_shape=jax.ShapeDtypeStruct((B * S, D), jnp.bfloat16),
        grid=(B,),
        in_specs=[
            pl.BlockSpec((S, D), lambda b: (b, 0)),        # x rows of batch b
            full_spec(wf_t), full_spec(wkvb_t), full_spec(wo_t),
            full_spec(cos_q), full_spec(sin_q), full_spec(cos_k), full_spec(sin_k),
        ],
        out_specs=pl.BlockSpec((S, D), lambda b: (b, 0)),
        compiler_params=pltpu.CompilerParams(dimension_semantics=("parallel",)),
    )(x2, wf_t, wkvb_t, wo_t, cos_q, sin_q, cos_k, sin_k)
    return out.reshape(B, S, D)


# ------------------------------- pure-JAX reference ----------------------------------
def mla_reference(x, wq, wkva, kvnorm, wkvb, wo, cos, sin, mask):
    B, S, D = x.shape

    def rope(t):  # t: (..., 16), interleaved pairs
        tr = t.reshape(*t.shape[:-1], QK_ROPE // 2, 2)
        re, im = tr[..., 0], tr[..., 1]
        c = cos.reshape((1, S) + (1,) * (t.ndim - 3) + (QK_ROPE // 2,))
        s = sin.reshape((1, S) + (1,) * (t.ndim - 3) + (QK_ROPE // 2,))
        out = jnp.stack([re * c - im * s, re * s + im * c], axis=-1)
        return out.reshape(t.shape)

    q = x @ wq.T                                                    # (B, S, 48)
    q = q.reshape(B, S, N_LOCAL_HEADS, QK_HEAD_DIM)
    q_nope, q_pe = q[..., :QK_NOPE], q[..., QK_NOPE:]
    q_pe = rope(q_pe)

    kv = x @ wkva.T                                                 # (B, S, 80)
    kv_lat, k_pe = kv[..., :KV_LORA_RANK], kv[..., KV_LORA_RANK:]
    k_pe = rope(k_pe[:, :, None, :])                                # (B, S, 1, 16)

    ms = jnp.mean(kv_lat * kv_lat, axis=-1, keepdims=True)
    kv_n = kv_lat * jax.lax.rsqrt(ms + RMS_EPS) * kvnorm.reshape(-1)
    kvb = (kv_n @ wkvb.T).reshape(B, S, N_LOCAL_HEADS, QK_NOPE + V_HEAD_DIM)
    k_nope, v = kvb[..., :QK_NOPE], kvb[..., QK_NOPE:]

    k = jnp.concatenate([k_nope, jnp.broadcast_to(k_pe, (B, S, N_LOCAL_HEADS, QK_ROPE))], axis=-1)
    q_cat = jnp.concatenate([q_nope, q_pe], axis=-1)
    scores = jnp.einsum('bshd,bthd->bsht', q_cat, k) * SOFTMAX_SCALE
    scores = scores + mask[:, None, :]
    attn = jax.nn.softmax(scores.astype(jnp.float32), axis=-1)
    out = jnp.einsum('bsht,bthd->bshd', attn, v)
    return out.reshape(B, S, N_LOCAL_HEADS * V_HEAD_DIM) @ wo.T


# ------------------------------- main -------------------------------------------------
if __name__ == "__main__":
    B, S, D = 2, 8, DIM

    key = jax.random.PRNGKey(0)
    k_x, k_wq, k_wkva, k_wkvb, k_wo = jax.random.split(key, 5)

    def xavier(k, shape):
        fan_out, fan_in = shape
        std = math.sqrt(2.0 / (fan_in + fan_out))
        return (std * jax.random.normal(k, shape)).astype(jnp.float32)

    x = jax.random.normal(k_x, (B, S, D), dtype=jnp.float32)

    wq = xavier(k_wq, (N_LOCAL_HEADS * QK_HEAD_DIM, D))             # (48, 256)
    wkva = xavier(k_wkva, (KV_LORA_RANK + QK_ROPE, D))              # (80, 256)
    kvnorm = jnp.ones((KV_LORA_RANK,), dtype=jnp.float32)           # RMSNorm weight
    wkvb = xavier(k_wkvb, (N_LOCAL_HEADS * (QK_NOPE + V_HEAD_DIM), KV_LORA_RANK))  # (64, 64)
    wo = xavier(k_wo, (D, N_LOCAL_HEADS * V_HEAD_DIM))              # (256, 32)

    # One-time preparation (hoisted out of the per-call path).
    params = prepare_mla_params(wq, wkva, kvnorm, wkvb, wo)
    rope_tables = make_rope_tables(S)

    out = jax.block_until_ready(mla_forward(x, params, rope_tables))

    # f32 reference (rope tables + causal mask built here)
    inv_freq = 1.0 / (ROPE_THETA ** (jnp.arange(0, QK_ROPE, 2, dtype=jnp.float32) / QK_ROPE))
    angles = jnp.arange(S, dtype=jnp.float32)[:, None] * inv_freq[None, :]   # (S, 8)
    cos, sin = jnp.cos(angles), jnp.sin(angles)
    mask = jnp.triu(jnp.full((S, S), -jnp.inf, dtype=jnp.float32), k=1)

    ref = jax.block_until_ready(mla_reference(x, wq, wkva, kvnorm, wkvb, wo, cos, sin, mask))

    assert out.shape == (B, S, D), out.shape
    out_f32 = out.astype(jnp.float32)
    # bf16 MXU operands + bf16 output -> looser tolerance than pure f32
    err = float(jnp.max(jnp.abs(out_f32 - ref)))
    assert jnp.allclose(out_f32, ref, rtol=1e-1, atol=5e-2), err

    print("KERNEL_OK")
</pallas_src>

<mosaic_0001>
module attributes {stable_mosaic.version = 11 : i64} {
  func.func @mla_kernel(%arg0: i32, %arg1: memref<8x256xbf16, #tpu.memory_space<vmem>>, %arg2: memref<256x192xbf16, #tpu.memory_space<vmem>>, %arg3: memref<64x64xbf16, #tpu.memory_space<vmem>>, %arg4: memref<32x256xbf16, #tpu.memory_space<vmem>>, %arg5: memref<8x48xf32, #tpu.memory_space<vmem>>, %arg6: memref<8x48xf32, #tpu.memory_space<vmem>>, %arg7: memref<8x16xf32, #tpu.memory_space<vmem>>, %arg8: memref<8x16xf32, #tpu.memory_space<vmem>>, %arg9: memref<8x256xbf16, #tpu.memory_space<vmem>>) attributes {dimension_semantics = [#tpu.dimension_semantics<parallel>], iteration_bounds = array<i64: 2>, scalar_prefetch = 0 : i64, scratch_operands = 0 : i64, tpu.core_type = #tpu.core_type<tc>, window_params = [{transform_indices = @transform_0, window_bounds = array<i64: 8, 256>}, {pipeline_mode = #tpu.pipeline_mode<synchronous>, transform_indices = @transform_1, window_bounds = array<i64: 256, 192>}, {pipeline_mode = #tpu.pipeline_mode<synchronous>, transform_indices = @transform_2, window_bounds = array<i64: 64, 64>}, {pipeline_mode = #tpu.pipeline_mode<synchronous>, transform_indices = @transform_3, window_bounds = array<i64: 32, 256>}, {pipeline_mode = #tpu.pipeline_mode<synchronous>, transform_indices = @transform_4, window_bounds = array<i64: 8, 48>}, {pipeline_mode = #tpu.pipeline_mode<synchronous>, transform_indices = @transform_5, window_bounds = array<i64: 8, 48>}, {pipeline_mode = #tpu.pipeline_mode<synchronous>, transform_indices = @transform_6, window_bounds = array<i64: 8, 16>}, {pipeline_mode = #tpu.pipeline_mode<synchronous>, transform_indices = @transform_7, window_bounds = array<i64: 8, 16>}, {transform_indices = @transform_8, window_bounds = array<i64: 8, 256>}]} {
    %c0 = arith.constant 0 : index
    %c0_0 = arith.constant 0 : index
    %0 = vector.load %arg1[%c0, %c0_0] : memref<8x256xbf16, #tpu.memory_space<vmem>>, vector<8x256xbf16>
    %c0_1 = arith.constant 0 : index
    %c0_2 = arith.constant 0 : index
    %1 = vector.load %arg2[%c0_1, %c0_2] : memref<256x192xbf16, #tpu.memory_space<vmem>>, vector<256x192xbf16>
    %cst = arith.constant dense<0.000000e+00> : vector<8x192xf32>
    %2 = tpu.matmul %0, %1, %cst {dimension_numbers = #tpu.dot_dimension_numbers<[1], [0], [0], [1], [0, 0, 1, 1], [], []>} : vector<8x256xbf16>, vector<256x192xbf16>, vector<8x192xf32> -> vector<8x192xf32>
    %3 = vector.extract_strided_slice %2 {offsets = [0, 0], sizes = [8, 48], strides = [1, 1]} : vector<8x192xf32> to vector<8x48xf32>
    %c0_3 = arith.constant 0 : index
    %c0_4 = arith.constant 0 : index
    %4 = vector.load %arg5[%c0_3, %c0_4] : memref<8x48xf32, #tpu.memory_space<vmem>>, vector<8x48xf32>
    %5 = arith.mulf %3, %4 : vector<8x48xf32>
    %6 = vector.extract_strided_slice %2 {offsets = [0, 48], sizes = [8, 48], strides = [1, 1]} : vector<8x192xf32> to vector<8x48xf32>
    %c0_5 = arith.constant 0 : index
    %c0_6 = arith.constant 0 : index
    %7 = vector.load %arg6[%c0_5, %c0_6] : memref<8x48xf32, #tpu.memory_space<vmem>>, vector<8x48xf32>
    %8 = arith.mulf %6, %7 : vector<8x48xf32>
    %9 = arith.addf %5, %8 : vector<8x48xf32>
    %10 = vector.extract_strided_slice %2 {offsets = [0, 96], sizes = [8, 16], strides = [1, 1]} : vector<8x192xf32> to vector<8x16xf32>
    %c0_7 = arith.constant 0 : index
    %c0_8 = arith.constant 0 : index
    %11 = vector.load %arg7[%c0_7, %c0_8] : memref<8x16xf32, #tpu.memory_space<vmem>>, vector<8x16xf32>
    %12 = arith.mulf %10, %11 : vector<8x16xf32>
    %13 = vector.extract_strided_slice %2 {offsets = [0, 112], sizes = [8, 16], strides = [1, 1]} : vector<8x192xf32> to vector<8x16xf32>
    %c0_9 = arith.constant 0 : index
    %c0_10 = arith.constant 0 : index
    %14 = vector.load %arg8[%c0_9, %c0_10] : memref<8x16xf32, #tpu.memory_space<vmem>>, vector<8x16xf32>
    %15 = arith.mulf %13, %14 : vector<8x16xf32>
    %16 = arith.addf %12, %15 : vector<8x16xf32>
    %17 = vector.extract_strided_slice %2 {offsets = [0, 128], sizes = [8, 64], strides = [1, 1]} : vector<8x192xf32> to vector<8x64xf32>
    %18 = arith.mulf %17, %17 : vector<8x64xf32>
    %cst_11 = arith.constant dense<0.000000e+00> : vector<8xf32>
    %19 = vector.multi_reduction <add>, %18, %cst_11 [1] : vector<8x64xf32> to vector<8xf32>
    %20 = vector.shape_cast %19 : vector<8xf32> to vector<8x1xf32>
    %cst_12 = arith.constant 6.400000e+01 : f32
    %21 = vector.broadcast %cst_12 : f32 to vector<8x1xf32>
    %22 = arith.divf %20, %21 : vector<8x1xf32>
    %cst_13 = arith.constant 9.99999997E-7 : f32
    %23 = vector.broadcast %cst_13 : f32 to vector<8x1xf32>
    %24 = arith.addf %22, %23 : vector<8x1xf32>
    %25 = math.rsqrt %24 : vector<8x1xf32>
    %26 = vector.broadcast %25 : vector<8x1xf32> to vector<8x64xf32>
    %27 = arith.mulf %17, %26 : vector<8x64xf32>
    %28 = arith.truncf %27 : vector<8x64xf32> to vector<8x64xbf16>
    %c0_14 = arith.constant 0 : index
    %c0_15 = arith.constant 0 : index
    %29 = vector.load %arg3[%c0_14, %c0_15] : memref<64x64xbf16, #tpu.memory_space<vmem>>, vector<64x64xbf16>
    %cst_16 = arith.constant dense<0.000000e+00> : vector<8x64xf32>
    %30 = tpu.matmul %28, %29, %cst_16 {dimension_numbers = #tpu.dot_dimension_numbers<[1], [0], [0], [1], [0, 0, 1, 1], [], []>} : vector<8x64xbf16>, vector<64x64xbf16>, vector<8x64xf32> -> vector<8x64xf32>
    %31 = vector.extract_strided_slice %30 {offsets = [0, 0], sizes = [8, 32], strides = [1, 1]} : vector<8x64xf32> to vector<8x32xf32>
    %32 = vector.extract_strided_slice %30 {offsets = [0, 32], sizes = [8, 32], strides = [1, 1]} : vector<8x64xf32> to vector<8x32xf32>
    %33 = tpu.concatenate %31, %16 in 1 : vector<8x32xf32>, vector<8x16xf32> -> vector<8x48xf32>
    %34 = arith.truncf %9 : vector<8x48xf32> to vector<8x48xbf16>
    %35 = arith.truncf %33 : vector<8x48xf32> to vector<8x48xbf16>
    %cst_17 = arith.constant dense<0.000000e+00> : vector<8x8xf32>
    %36 = tpu.matmul %34, %35, %cst_17 {dimension_numbers = #tpu.dot_dimension_numbers<[1], [1], [0], [0], [0, 0, 1, 0], [], []>} : vector<8x48xbf16>, vector<8x48xbf16>, vector<8x8xf32> -> vector<8x8xf32>
    %37 = tpu.iota {dimensions = array<i32: 0>} : vector<8x8xi32>
    %38 = tpu.iota {dimensions = array<i32: 1>} : vector<8x8xi32>
    %39 = arith.cmpi sle, %38, %37 : vector<8x8xi32>
    %cst_18 = arith.constant -1.000000e+30 : f32
    %40 = vector.broadcast %cst_18 : f32 to vector<8x8xf32>
    %41 = arith.select %39, %36, %40 : vector<8x8xi1>, vector<8x8xf32>
    %cst_19 = arith.constant dense<0xFF800000> : vector<8xf32>
    %42 = vector.multi_reduction <maximumf>, %41, %cst_19 [1] : vector<8x8xf32> to vector<8xf32>
    %43 = vector.shape_cast %42 : vector<8xf32> to vector<8x1xf32>
    %44 = vector.broadcast %43 : vector<8x1xf32> to vector<8x8xf32>
    %45 = arith.subf %41, %44 : vector<8x8xf32>
    %46 = math.exp %45 : vector<8x8xf32>
    %cst_20 = arith.constant dense<0.000000e+00> : vector<8xf32>
    %47 = vector.multi_reduction <add>, %46, %cst_20 [1] : vector<8x8xf32> to vector<8xf32>
    %48 = vector.shape_cast %47 : vector<8xf32> to vector<8x1xf32>
    %49 = tpu.reciprocal %48 : vector<8x1xf32> -> vector<8x1xf32>
    %50 = vector.broadcast %49 : vector<8x1xf32> to vector<8x8xf32>
    %51 = arith.mulf %46, %50 : vector<8x8xf32>
    %52 = arith.truncf %51 : vector<8x8xf32> to vector<8x8xbf16>
    %53 = arith.truncf %32 : vector<8x32xf32> to vector<8x32xbf16>
    %cst_21 = arith.constant dense<0.000000e+00> : vector<8x32xf32>
    %54 = tpu.matmul %52, %53, %cst_21 {dimension_numbers = #tpu.dot_dimension_numbers<[1], [0], [0], [1], [0, 0, 1, 1], [], []>} : vector<8x8xbf16>, vector<8x32xbf16>, vector<8x32xf32> -> vector<8x32xf32>
    %55 = arith.truncf %54 : vector<8x32xf32> to vector<8x32xbf16>
    %c0_22 = arith.constant 0 : index
    %c0_23 = arith.constant 0 : index
    %56 = vector.load %arg4[%c0_22, %c0_23] : memref<32x256xbf16, #tpu.memory_space<vmem>>, vector<32x256xbf16>
    %cst_24 = arith.constant dense<0.000000e+00> : vector<8x256xf32>
    %57 = tpu.matmul %55, %56, %cst_24 {dimension_numbers = #tpu.dot_dimension_numbers<[1], [0], [0], [1], [0, 0, 1, 1], [], []>} : vector<8x32xbf16>, vector<32x256xbf16>, vector<8x256xf32> -> vector<8x256xf32>
    %58 = arith.truncf %57 : vector<8x256xf32> to vector<8x256xbf16>
    %c0_25 = arith.constant 0 : index
    %c0_26 = arith.constant 0 : index
    %59 = vector.load %arg9[%c0_25, %c0_26] : memref<8x256xbf16, #tpu.memory_space<vmem>>, vector<8x256xbf16>
    tpu.vector_store %arg9[%c0_25, %c0_26], %58 {strides = array<i32>} : memref<8x256xbf16, #tpu.memory_space<vmem>>, vector<8x256xbf16>,
    return
  }
  func.func @transform_0(%arg0: i32) -> (i32, i32) {
    %c0_i32 = arith.constant 0 : i32
    %c0_i32_0 = arith.constant 0 : i32
    return %arg0, %c0_i32 : i32, i32
  }
  func.func @transform_1(%arg0: i32) -> (i32, i32) {
    %c0_i32 = arith.constant 0 : i32
    %c0_i32_0 = arith.constant 0 : i32
    %c0_i32_1 = arith.constant 0 : i32
    return %c0_i32, %c0_i32_0 : i32, i32
  }
  func.func @transform_2(%arg0: i32) -> (i32, i32) {
    %c0_i32 = arith.constant 0 : i32
    %c0_i32_0 = arith.constant 0 : i32
    %c0_i32_1 = arith.constant 0 : i32
    return %c0_i32, %c0_i32_0 : i32, i32
  }
  func.func @transform_3(%arg0: i32) -> (i32, i32) {
    %c0_i32 = arith.constant 0 : i32
    %c0_i32_0 = arith.constant 0 : i32
    %c0_i32_1 = arith.constant 0 : i32
    return %c0_i32, %c0_i32_0 : i32, i32
  }
  func.func @transform_4(%arg0: i32) -> (i32, i32) {
    %c0_i32 = arith.constant 0 : i32
    %c0_i32_0 = arith.constant 0 : i32
    %c0_i32_1 = arith.constant 0 : i32
    return %c0_i32, %c0_i32_0 : i32, i32
  }
  func.func @transform_5(%arg0: i32) -> (i32, i32) {
    %c0_i32 = arith.constant 0 : i32
    %c0_i32_0 = arith.constant 0 : i32
    %c0_i32_1 = arith.constant 0 : i32
    return %c0_i32, %c0_i32_0 : i32, i32
  }
  func.func @transform_6(%arg0: i32) -> (i32, i32) {
    %c0_i32 = arith.constant 0 : i32
    %c0_i32_0 = arith.constant 0 : i32
    %c0_i32_1 = arith.constant 0 : i32
    return %c0_i32, %c0_i32_0 : i32, i32
  }
  func.func @transform_7(%arg0: i32) -> (i32, i32) {
    %c0_i32 = arith.constant 0 : i32
    %c0_i32_0 = arith.constant 0 : i32
    %c0_i32_1 = arith.constant 0 : i32
    return %c0_i32, %c0_i32_0 : i32, i32
  }
  func.func @transform_8(%arg0: i32) -> (i32, i32) {
    %c0_i32 = arith.constant 0 : i32
    %c0_i32_0 = arith.constant 0 : i32
    return %arg0, %c0_i32 : i32, i32
  }
}

</mosaic_0001>

<llo_original>
// kernel: mla_forward.1
$region0: #{mla_forward.1}
  #allocation0 [shape = 'u32[]', space=smem, size = 0x4, offset = 0x4, fixed_abs, tag = 'smem constant byte address 0x4 - core index']
  #allocation1 [shape = 'u32[72,128]{1,0:T(1,128)}', space=vmem, size = 0x9000, scoped, tag = 'internal scratch']
  %s0 = inlined_call_operand.vmem [shape: bf16[16,256], index: 0, kind: input, shape index: {}]
  %s1 = inlined_call_operand.vmem [shape: bf16[256,192], index: 1, kind: input, shape index: {}]
  %s2 = inlined_call_operand.vmem [shape: bf16[64,64], index: 2, kind: input, shape index: {}]
  %s3 = inlined_call_operand.vmem [shape: bf16[32,256], index: 3, kind: input, shape index: {}]
  %s4 = inlined_call_operand.vmem [shape: f32[8,48], index: 4, kind: input, shape index: {}]
  %s5 = inlined_call_operand.vmem [shape: f32[8,48], index: 5, kind: input, shape index: {}]
  %s6 = inlined_call_operand.vmem [shape: f32[8,16], index: 6, kind: input, shape index: {}]
  %s7 = inlined_call_operand.vmem [shape: f32[8,16], index: 7, kind: input, shape index: {}]
  %s8 = inlined_call_operand.hbm [shape: bf16[16,256], index: 8, kind: output, shape index: {}]
  %s9 = sld [smem:[#allocation0]]
  $region65: #{mla_forward.1} parent=0
    _
  %s11 = ssub.s32 1, %s9
  %s12 = scalar_select 0, %s11, %s9
  $region1: #{mla_forward.1} parent=0
    #allocation2 [shape = 'u8[8192]{0}', space=vmem, size = 0x2000, scoped, tag = 'output window, operand 0']
    #allocation3 [shape = 's32[2]{0}', space=sflag, size = 0x8, scoped, tag = 'scoped memory for mla_forward.1']
    %13 = vsyncpa [#allocation3], 0
    %s14 = scalar_lea.sflag [#allocation3], 1
    %15 = vsyncpa %s14, 0
    loop: start=0, step=1, limit=4
    $region2: #{mla_forward.1} parent=1 // loop_pre_header
      _
    $region3: #{mla_forward.1} parent=1 // loop_header
      %s17 = sphi 0, %s21
      %p18 = scmp.ge.s32.totalorder %s17, 4
      %s27 = sphi 0, %s29
      %s30 = sphi 0, %s27
      %s31 = sphi 0, %s30
      %s47 = sphi 0, %s31
      %s51 = sphi 0, %s51
      %s53 = sphi 0, %s51
      %s54 = sphi 0, %s53
      %s68 = sphi 0, %s54
      %s72 = sphi 0, %s72
      %s74 = sphi 0, %s72
      %s75 = sphi 0, %s74
      %s89 = sphi 0, %s75
      %s93 = sphi 0, %s93
      %s95 = sphi 0, %s93
      %s96 = sphi 0, %s95
      %s110 = sphi 0, %s96
      %s114 = sphi 0, %s114
      %s116 = sphi 0, %s114
      %s117 = sphi 0, %s116
      %s131 = sphi 0, %s117
      %s135 = sphi 0, %s135
      %s137 = sphi 0, %s135
      %s138 = sphi 0, %s137
      %s152 = sphi 0, %s138
      %s156 = sphi 0, %s156
      %s158 = sphi 0, %s156
      %s159 = sphi 0, %s158
      %s173 = sphi 0, %s159
      %s177 = sphi 0, %s177
      %s179 = sphi 0, %s177
      %s180 = sphi 0, %s179
      %s194 = sphi 0, %s180
      %s200 = sphi 0, %s202
      %s203 = sphi 0, %s200
      %s204 = sphi 0, %s203
      %s220 = sphi 0, %s204
    $region4: #{mla_forward.1} parent=1 // loop_header_branch
      %20 = sbr.rel (%p18) target = $region8
    $region5: #{mla_forward.1} parent=1 // loop_body
      %s22 = ssub.s32 %s17, 1
      %s23 = ssub.s32 %s17, 2
      %s24 = sadd.s32 %s17, 1
      %s25 = ssub.s32 %s17, %s24
      %p26 = scmp.eq.s32.totalorder %s25, 0
      %s28 = sadd.s32 %s27, 1
      %s29 = scalar_select %p26, %s27, %s28
      %p32 = pneg %p26
      %p33 = scmp.eq.s32.totalorder %s17, 1
      %p34 = por %p32, %p33
      %p35 = scmp.ne.s32.totalorder %s27, %s30
      %p36 = scmp.eq.s32.totalorder %s17, 0
      %p37 = por %p35, %p36
      %p38 = scmp.ne.s32.totalorder %s27, %s30
      %p39 = scmp.eq.s32.totalorder %s22, 1
      %p40 = por %p38, %p39
      %p41 = scmp.ne.s32.totalorder %s30, %s31
      %p42 = scmp.eq.s32.totalorder %s22, 0
      %p43 = por %p41, %p42
      %p44 = scmp.ne.s32.totalorder %s30, %s31
      %p45 = scmp.eq.s32.totalorder %s23, 1
      %p46 = por %p44, %p45
      %p48 = scmp.ne.s32.totalorder %s31, %s47
      %p49 = scmp.eq.s32.totalorder %s23, 0
      %p50 = por %p48, %p49
      %s52 = sadd.s32 %s51, 1
      %p55 = scmp.eq.s32.totalorder %s17, 1
      %p56 = scmp.ne.s32.totalorder %s51, %s53
      %p57 = scmp.eq.s32.totalorder %s17, 0
      %p58 = por %p56, %p57
      %p59 = scmp.ne.s32.totalorder %s51, %s53
      %p60 = scmp.eq.s32.totalorder %s22, 1
      %p61 = por %p59, %p60
      %p62 = scmp.ne.s32.totalorder %s53, %s54
      %p63 = scmp.eq.s32.totalorder %s22, 0
      %p64 = por %p62, %p63
      %p65 = scmp.ne.s32.totalorder %s53, %s54
      %p66 = scmp.eq.s32.totalorder %s23, 1
      %p67 = por %p65, %p66
      %p69 = scmp.ne.s32.totalorder %s54, %s68
      %p70 = scmp.eq.s32.totalorder %s23, 0
      %p71 = por %p69, %p70
      %s73 = sadd.s32 %s72, 1
      %p76 = scmp.eq.s32.totalorder %s17, 1
      %p77 = scmp.ne.s32.totalorder %s72, %s74
      %p78 = scmp.eq.s32.totalorder %s17, 0
      %p79 = por %p77, %p78
      %p80 = scmp.ne.s32.totalorder %s72, %s74
      %p81 = scmp.eq.s32.totalorder %s22, 1
      %p82 = por %p80, %p81
      %p83 = scmp.ne.s32.totalorder %s74, %s75
      %p84 = scmp.eq.s32.totalorder %s22, 0
      %p85 = por %p83, %p84
      %p86 = scmp.ne.s32.totalorder %s74, %s75
      %p87 = scmp.eq.s32.totalorder %s23, 1
      %p88 = por %p86, %p87
      %p90 = scmp.ne.s32.totalorder %s75, %s89
      %p91 = scmp.eq.s32.totalorder %s23, 0
      %p92 = por %p90, %p91
      %s94 = sadd.s32 %s93, 1
      %p97 = scmp.eq.s32.totalorder %s17, 1
      %p98 = scmp.ne.s32.totalorder %s93, %s95
      %p99 = scmp.eq.s32.totalorder %s17, 0
      %p100 = por %p98, %p99
      %p101 = scmp.ne.s32.totalorder %s93, %s95
      %p102 = scmp.eq.s32.totalorder %s22, 1
      %p103 = por %p101, %p102
      %p104 = scmp.ne.s32.totalorder %s95, %s96
      %p105 = scmp.eq.s32.totalorder %s22, 0
      %p106 = por %p104, %p105
      %p107 = scmp.ne.s32.totalorder %s95, %s96
      %p108 = scmp.eq.s32.totalorder %s23, 1
      %p109 = por %p107, %p108
      %p111 = scmp.ne.s32.totalorder %s96, %s110
      %p112 = scmp.eq.s32.totalorder %s23, 0
      %p113 = por %p111, %p112
      %s115 = sadd.s32 %s114, 1
      %p118 = scmp.eq.s32.totalorder %s17, 1
      %p119 = scmp.ne.s32.totalorder %s114, %s116
      %p120 = scmp.eq.s32.totalorder %s17, 0
      %p121 = por %p119, %p120
      %p122 = scmp.ne.s32.totalorder %s114, %s116
      %p123 = scmp.eq.s32.totalorder %s22, 1
      %p124 = por %p122, %p123
      %p125 = scmp.ne.s32.totalorder %s116, %s117
      %p126 = scmp.eq.s32.totalorder %s22, 0
      %p127 = por %p125, %p126
      %p128 = scmp.ne.s32.totalorder %s116, %s117
      %p129 = scmp.eq.s32.totalorder %s23, 1
      %p130 = por %p128, %p129
      %p132 = scmp.ne.s32.totalorder %s117, %s131
      %p133 = scmp.eq.s32.totalorder %s23, 0
      %p134 = por %p132, %p133
      %s136 = sadd.s32 %s135, 1
      %p139 = scmp.eq.s32.totalorder %s17, 1
      %p140 = scmp.ne.s32.totalorder %s135, %s137
      %p141 = scmp.eq.s32.totalorder %s17, 0
      %p142 = por %p140, %p141
      %p143 = scmp.ne.s32.totalorder %s135, %s137
      %p144 = scmp.eq.s32.totalorder %s22, 1
      %p145 = por %p143, %p144
      %p146 = scmp.ne.s32.totalorder %s137, %s138
      %p147 = scmp.eq.s32.totalorder %s22, 0
      %p148 = por %p146, %p147
      %p149 = scmp.ne.s32.totalorder %s137, %s138
      %p150 = scmp.eq.s32.totalorder %s23, 1
      %p151 = por %p149, %p150
      %p153 = scmp.ne.s32.totalorder %s138, %s152
      %p154 = scmp.eq.s32.totalorder %s23, 0
      %p155 = por %p153, %p154
      %s157 = sadd.s32 %s156, 1
      %p160 = scmp.eq.s32.totalorder %s17, 1
      %p161 = scmp.ne.s32.totalorder %s156, %s158
      %p162 = scmp.eq.s32.totalorder %s17, 0
      %p163 = por %p161, %p162
      %p164 = scmp.ne.s32.totalorder %s156, %s158
      %p165 = scmp.eq.s32.totalorder %s22, 1
      %p166 = por %p164, %p165
      %p167 = scmp.ne.s32.totalorder %s158, %s159
      %p168 = scmp.eq.s32.totalorder %s22, 0
      %p169 = por %p167, %p168
      %p170 = scmp.ne.s32.totalorder %s158, %s159
      %p171 = scmp.eq.s32.totalorder %s23, 1
      %p172 = por %p170, %p171
      %p174 = scmp.ne.s32.totalorder %s159, %s173
      %p175 = scmp.eq.s32.totalorder %s23, 0
      %p176 = por %p174, %p175
      %s178 = sadd.s32 %s177, 1
      %p181 = scmp.eq.s32.totalorder %s17, 1
      %p182 = scmp.ne.s32.totalorder %s177, %s179
      %p183 = scmp.eq.s32.totalorder %s17, 0
      %p184 = por %p182, %p183
      %p185 = scmp.ne.s32.totalorder %s177, %s179
      %p186 = scmp.eq.s32.totalorder %s22, 1
      %p187 = por %p185, %p186
      %p188 = scmp.ne.s32.totalorder %s179, %s180
      %p189 = scmp.eq.s32.totalorder %s22, 0
      %p190 = por %p188, %p189
      %p191 = scmp.ne.s32.totalorder %s179, %s180
      %p192 = scmp.eq.s32.totalorder %s23, 1
      %p193 = por %p191, %p192
      %p195 = scmp.ne.s32.totalorder %s180, %s194
      %p196 = scmp.eq.s32.totalorder %s23, 0
      %p197 = por %p195, %p196
      %s198 = ssub.s32 %s17, %s24
      %p199 = scmp.eq.s32.totalorder %s198, 0
      %s201 = sadd.s32 %s200, 1
      %s202 = scalar_select %p199, %s200, %s201
      %p205 = pneg %p199
      %p206 = scmp.eq.s32.totalorder %s17, 1
      %p207 = por %p205, %p206
      %p208 = scmp.ne.s32.totalorder %s200, %s203
      %p209 = scmp.eq.s32.totalorder %s17, 0
      %p210 = por %p208, %p209
      %p211 = scmp.ne.s32.totalorder %s200, %s203
      %p212 = scmp.eq.s32.totalorder %s22, 1
      %p213 = por %p211, %p212
      %p214 = scmp.ne.s32.totalorder %s203, %s204
      %p215 = scmp.eq.s32.totalorder %s22, 0
      %p216 = por %p214, %p215
      %p217 = scmp.ne.s32.totalorder %s203, %s204
      %p218 = scmp.eq.s32.totalorder %s23, 1
      %p219 = por %p217, %p218
      %p221 = scmp.ne.s32.totalorder %s204, %s220
      %p222 = scmp.eq.s32.totalorder %s23, 0
      %p223 = por %p221, %p222
      %p224 = scmp.le.s32.totalorder 1, %s17
      %p225 = scmp.lt.s32.totalorder %s17, 3
      %p226 = pnand %p224, %p225
      %p227 = pneg %p226
      // Predicated region
      $region9: #{mla_forward.1} parent=5 // pred_check
        _
      $region10: #{mla_forward.1} parent=5 // pred_check_branch
        %229 = sbr.rel (%p226) target = $region12
      $region11: #{mla_forward.1} parent=5 // pred_region
        %s230 = ssub.s32 %s17, 1
        // Predicated region
        $region13: #{mla_forward.1} parent=11 // pred_check
          %p231 = pneg %p64
        $region14: #{mla_forward.1} parent=11 // pred_check_branch
          %233 = sbr.rel (%p231) target = $region16
        $region15: #{mla_forward.1} parent=11 // pred_region
          _
        $region16: #{mla_forward.1} parent=11 // pred_fallthru
          _
        // Predicated region
        $region17: #{mla_forward.1} parent=11 // pred_check
          %p234 = pneg %p85
        $region18: #{mla_forward.1} parent=11 // pred_check_branch
          %236 = sbr.rel (%p234) target = $region20
        $region19: #{mla_forward.1} parent=11 // pred_region
          _
        $region20: #{mla_forward.1} parent=11 // pred_fallthru
          _
        // Predicated region
        $region21: #{mla_forward.1} parent=11 // pred_check
          %p237 = pneg %p106
        $region22: #{mla_forward.1} parent=11 // pred_check_branch
          %239 = sbr.rel (%p237) target = $region24
        $region23: #{mla_forward.1} parent=11 // pred_region
          _
        $region24: #{mla_forward.1} parent=11 // pred_fallthru
          _
        // Predicated region
        $region25: #{mla_forward.1} parent=11 // pred_check
          %p240 = pneg %p127
        $region26: #{mla_forward.1} parent=11 // pred_check_branch
          %242 = sbr.rel (%p240) target = $region28
        $region27: #{mla_forward.1} parent=11 // pred_region
          _
        $region28: #{mla_forward.1} parent=11 // pred_fallthru
          _
        // Predicated region
        $region29: #{mla_forward.1} parent=11 // pred_check
          %p243 = pneg %p148
        $region30: #{mla_forward.1} parent=11 // pred_check_branch
          %245 = sbr.rel (%p243) target = $region32
        $region31: #{mla_forward.1} parent=11 // pred_region
          _
        $region32: #{mla_forward.1} parent=11 // pred_fallthru
          _
        // Predicated region
        $region33: #{mla_forward.1} parent=11 // pred_check
          %p246 = pneg %p169
        $region34: #{mla_forward.1} parent=11 // pred_check_branch
          %248 = sbr.rel (%p246) target = $region36
        $region35: #{mla_forward.1} parent=11 // pred_region
          _
        $region36: #{mla_forward.1} parent=11 // pred_fallthru
          _
        // Predicated region
        $region37: #{mla_forward.1} parent=11 // pred_check
          %p249 = pneg %p190
        $region38: #{mla_forward.1} parent=11 // pred_check_branch
          %251 = sbr.rel (%p249) target = $region40
        $region39: #{mla_forward.1} parent=11 // pred_region
          _
        $region40: #{mla_forward.1} parent=11 // pred_fallthru
          _
      $region12: #{mla_forward.1} parent=5 // pred_fallthru
        _
      %p252 = scmp.lt.s32.totalorder %s17, 2
      // Predicated region
      $region41: #{mla_forward.1} parent=5 // pred_check
        %p253 = pneg %p252
      $region42: #{mla_forward.1} parent=5 // pred_check_branch
        %255 = sbr.rel (%p253) target = $region44
      $region43: #{mla_forward.1} parent=5 // pred_region
        // Predicated region
        $region45: #{mla_forward.1} parent=43 // pred_check
          %p256 = pneg %p37
        $region46: #{mla_forward.1} parent=43 // pred_check_branch
          %258 = sbr.rel (%p256) target = $region48
        $region47: #{mla_forward.1} parent=43 // pred_region
          %p259 = scmp.lt.s32.totalorder %s17, 1
          %s260 = scalar_select %p259, %s17, 1
          %s261 = smul.addr %s260, 2
          %s262 = smul.addr %s261, 4
          %s263 = scalar_lea.vmem %s0, %s262
        $region48: #{mla_forward.1} parent=43 // pred_fallthru
          _
      $region44: #{mla_forward.1} parent=5 // pred_fallthru
        _
      %p264 = scmp.le.s32.totalorder 1, %s17
      %p265 = scmp.lt.s32.totalorder %s17, 3
      %p266 = pnand %p264, %p265
      %p267 = pneg %p266
      // Predicated region
      $region49: #{mla_forward.1} parent=5 // pred_check
        _
      $region50: #{mla_forward.1} parent=5 // pred_check_branch
        %269 = sbr.rel (%p266) target = $region52
      $region51: #{mla_forward.1} parent=5 // pred_region
        %s270 = ssub.s32 %s17, 1
        %p271 = scmp.lt.s32.totalorder %s22, 1
        %s272 = scalar_select %p271, %s22, 1
        %s273 = smul.addr %s272, 2
        %s274 = smul.addr %s273, 4
        %s275 = scalar_lea.vmem %s0, %s274
        %p276 = pneg %p43
        %p277 = pneg %p40
        %p278 = pneg %p64
        %p279 = pneg %p61
        %p280 = pneg %p85
        %p281 = pneg %p82
        %p282 = pneg %p106
        %p283 = pneg %p103
        %p284 = pneg %p127
        %p285 = pneg %p124
        %p286 = pneg %p148
        %p287 = pneg %p145
        %p288 = pneg %p169
        %p289 = pneg %p166
        %p290 = pneg %p190
        %p291 = pneg %p187
        %p292 = pneg %p216
        %p293 = pneg %p213
        %s294 = sand.u32 %s203, 1
        %s295 = scalar_lea.sflag [#allocation3], %s294
        %s296 = sand.u32 %s203, 1
        %s297 = smul.addr %s296, 8
        %s298 = scalar_lea.vmem [#allocation2], %s297
        %p299 = scmp.lt.s32.totalorder %s22, 1
        %s300 = scalar_select %p299, %s22, 1
        %s301 = smul.addr %s300, 2
        %s302 = smul.addr %s301, 4
        %s303 = scalar_lea.vmem %s0, %s302
        %v305 = vld [vmem:[%s303] sm:$0xff]
        %v306 = vld [vmem:[%s1] sm:$0xff]
        %v307 = vld [vmem:[%s1 + $0x8] sm:$0xff]
        %v308 = vld [vmem:[%s1 + $0x10] sm:$0xff]
        %v309 = vld [vmem:[%s1 + $0x18] sm:$0xff]
        %v310 = vld [vmem:[%s1 + $0x20] sm:$0xff]
        %v311 = vld [vmem:[%s1 + $0x28] sm:$0xff]
        %v312 = vld [vmem:[%s1 + $0x30] sm:$0xff]
        %v313 = vld [vmem:[%s1 + $0x38] sm:$0xff]
        %v314 = vld [vmem:[%s1 + $0x40] sm:$0xff]
        %v315 = vld [vmem:[%s1 + $0x48] sm:$0xff]
        %v316 = vld [vmem:[%s1 + $0x50] sm:$0xff]
        %v317 = vld [vmem:[%s1 + $0x58] sm:$0xff]
        %v318 = vld [vmem:[%s1 + $0x60] sm:$0xff]
        %v319 = vld [vmem:[%s1 + $0x68] sm:$0xff]
        %v320 = vld [vmem:[%s1 + $0x70] sm:$0xff]
        %v321 = vld [vmem:[%s1 + $0x78] sm:$0xff]
        %v322 = vld [vmem:[%s1 + $0x80] sm:$0xff]
        %v323 = vld [vmem:[%s1 + $0x88] sm:$0xff]
        %v324 = vld [vmem:[%s1 + $0x90] sm:$0xff]
        %v325 = vld [vmem:[%s1 + $0x98] sm:$0xff]
        %v326 = vld [vmem:[%s1 + $0xa0] sm:$0xff]
        %v327 = vld [vmem:[%s1 + $0xa8] sm:$0xff]
        %v328 = vld [vmem:[%s1 + $0xb0] sm:$0xff]
        %v329 = vld [vmem:[%s1 + $0xb8] sm:$0xff]
        %v330 = vld [vmem:[%s1 + $0xc0] sm:$0xff]
        %v331 = vld [vmem:[%s1 + $0xc8] sm:$0xff]
        %v332 = vld [vmem:[%s1 + $0xd0] sm:$0xff]
        %v333 = vld [vmem:[%s1 + $0xd8] sm:$0xff]
        %v334 = vld [vmem:[%s1 + $0xe0] sm:$0xff]
        %v335 = vld [vmem:[%s1 + $0xe8] sm:$0xff]
        %v336 = vld [vmem:[%s1 + $0xf0] sm:$0xff]
        %v337 = vld [vmem:[%s1 + $0xf8] sm:$0xff]
        %v339 = vunpack.c.l.b16 %v305
        %v340 = vunpack.c.h.b16 %v305
        %v341 = vpack.c.b16 %v339, %v339
        %v342 = vpack.c.b16 %v340, %v340
        %v377 = vunpack.c.l.b16 %v306
        %v378 = vunpack.c.h.b16 %v306
        %v379 = vunpack.c.l.b16 %v307
        %v380 = vunpack.c.h.b16 %v307
        %v381 = vunpack.c.l.b16 %v308
        %v382 = vunpack.c.h.b16 %v308
        %v383 = vunpack.c.l.b16 %v309
        %v384 = vunpack.c.h.b16 %v309
        %v385 = vunpack.c.l.b16 %v310
        %v386 = vunpack.c.h.b16 %v310
        %v387 = vunpack.c.l.b16 %v311
        %v388 = vunpack.c.h.b16 %v311
        %v389 = vunpack.c.l.b16 %v312
        %v390 = vunpack.c.h.b16 %v312
        %v391 = vunpack.c.l.b16 %v313
        %v392 = vunpack.c.h.b16 %v313
        %v393 = vunpack.c.l.b16 %v314
        %v394 = vunpack.c.h.b16 %v314
        %v395 = vunpack.c.l.b16 %v315
        %v396 = vunpack.c.h.b16 %v315
        %v397 = vunpack.c.l.b16 %v316
        %v398 = vunpack.c.h.b16 %v316
        %v399 = vunpack.c.l.b16 %v317
        %v400 = vunpack.c.h.b16 %v317
        %v401 = vunpack.c.l.b16 %v318
        %v402 = vunpack.c.h.b16 %v318
        %v403 = vunpack.c.l.b16 %v319
        %v404 = vunpack.c.h.b16 %v319
        %v405 = vunpack.c.l.b16 %v320
        %v406 = vunpack.c.h.b16 %v320
        %v407 = vunpack.c.l.b16 %v321
        %v408 = vunpack.c.h.b16 %v321
        %v409 = vunpack.c.l.b16 %v322
        %v410 = vunpack.c.h.b16 %v322
        %v411 = vunpack.c.l.b16 %v323
        %v412 = vunpack.c.h.b16 %v323
        %v413 = vunpack.c.l.b16 %v324
        %v414 = vunpack.c.h.b16 %v324
        %v415 = vunpack.c.l.b16 %v325
        %v416 = vunpack.c.h.b16 %v325
        %v417 = vunpack.c.l.b16 %v326
        %v418 = vunpack.c.h.b16 %v326
        %v419 = vunpack.c.l.b16 %v327
        %v420 = vunpack.c.h.b16 %v327
        %v421 = vunpack.c.l.b16 %v328
        %v422 = vunpack.c.h.b16 %v328
        %v423 = vunpack.c.l.b16 %v329
        %v424 = vunpack.c.h.b16 %v329
        %v425 = vunpack.c.l.b16 %v330
        %v426 = vunpack.c.h.b16 %v330
        %v427 = vunpack.c.l.b16 %v331
        %v428 = vunpack.c.h.b16 %v331
        %v429 = vunpack.c.l.b16 %v332
        %v430 = vunpack.c.h.b16 %v332
        %v431 = vunpack.c.l.b16 %v333
        %v432 = vunpack.c.h.b16 %v333
        %v433 = vunpack.c.l.b16 %v334
        %v434 = vunpack.c.h.b16 %v334
        %v435 = vunpack.c.l.b16 %v335
        %v436 = vunpack.c.h.b16 %v335
        %v437 = vunpack.c.l.b16 %v336
        %v438 = vunpack.c.h.b16 %v336
        %v439 = vunpack.c.l.b16 %v337
        %v440 = vunpack.c.h.b16 %v337
        %v441 = vpack.c.b16 %v379, %v377
        %v442 = vpack.c.b16 %v380, %v378
        %v443 = vpack.c.b16 %v383, %v381
        %v444 = vpack.c.b16 %v384, %v382
        %v445 = vpack.c.b16 %v387, %v385
        %v446 = vpack.c.b16 %v388, %v386
        %v447 = vpack.c.b16 %v391, %v389
        %v448 = vpack.c.b16 %v392, %v390
        %v449 = vpack.c.b16 %v395, %v393
        %v450 = vpack.c.b16 %v396, %v394
        %v451 = vpack.c.b16 %v399, %v397
        %v452 = vpack.c.b16 %v400, %v398
        %v453 = vpack.c.b16 %v403, %v401
        %v454 = vpack.c.b16 %v404, %v402
        %v455 = vpack.c.b16 %v407, %v405
        %v456 = vpack.c.b16 %v408, %v406
        %v457 = vpack.c.b16 %v411, %v409
        %v458 = vpack.c.b16 %v412, %v410
        %v459 = vpack.c.b16 %v415, %v413
        %v460 = vpack.c.b16 %v416, %v414
        %v461 = vpack.c.b16 %v419, %v417
        %v462 = vpack.c.b16 %v420, %v418
        %v463 = vpack.c.b16 %v423, %v421
        %v464 = vpack.c.b16 %v424, %v422
        %v465 = vpack.c.b16 %v427, %v425
        %v466 = vpack.c.b16 %v428, %v426
        %v467 = vpack.c.b16 %v431, %v429
        %v468 = vpack.c.b16 %v432, %v430
        %v469 = vpack.c.b16 %v435, %v433
        %v470 = vpack.c.b16 %v436, %v434
        %v471 = vpack.c.b16 %v439, %v437
        %v472 = vpack.c.b16 %v440, %v438
        %505 = vmatpush.bf16.msra.mxu0 %v455
        %506 = vmatpush.bf16.msra.mxu0 %v453
        %507 = vmatpush.bf16.msra.mxu0 %v451
        %508 = vmatpush.bf16.msra.mxu0 %v449
        %509 = vmatpush.bf16.msra.mxu0 %v447
        %510 = vmatpush.bf16.msra.mxu0 %v445
        %511 = vmatpush.bf16.msra.mxu0 %v443
        %512 = vmatpush.bf16.msra.mxu0 %v441
        %513 = vmatmul.bf16.gmra.mxu0 %v341
        %v514 = vpop.f32.mrf.mxu0
        %v515 = vadd.f32 0.0, %v514
        %v516 = vpop.f32.mrf.mxu0
        %517 = vdwg.mxu0
        %518 = vmatpush.bf16.msra.mxu0 %v471
        %519 = vmatpush.bf16.msra.mxu0 %v469
        %520 = vmatpush.bf16.msra.mxu0 %v467
        %521 = vmatpush.bf16.msra.mxu0 %v465
        %522 = vmatpush.bf16.msra.mxu0 %v463
        %523 = vmatpush.bf16.msra.mxu0 %v461
        %524 = vmatpush.bf16.msra.mxu0 %v459
        %525 = vmatpush.bf16.msra.mxu0 %v457
        %526 = vmatmul.bf16.gmra.mxu0 %v342
        %v527 = vpop.f32.mrf.mxu0
        %v528 = vadd.f32 %v515, %v527
        %v529 = vpop.f32.mrf.mxu0
        %530 = vdwg.mxu0
        %531 = vmatpush.bf16.msra.mxu0 %v456
        %532 = vmatpush.bf16.msra.mxu0 %v454
        %533 = vmatpush.bf16.msra.mxu0 %v452
        %534 = vmatpush.bf16.msra.mxu0 %v450
        %535 = vmatpush.bf16.msra.mxu0 %v448
        %536 = vmatpush.bf16.msra.mxu0 %v446
        %537 = vmatpush.bf16.msra.mxu0 %v444
        %538 = vmatpush.bf16.msra.mxu0 %v442
        %539 = vmatmul.bf16.gmra.mxu0 %v341
        %v540 = vpop.f32.mrf.mxu0
        %v541 = vadd.f32 0.0, %v540
        %v542 = vpop.f32.mrf.mxu0
        %543 = vdwg.mxu0
        %544 = vmatpush.bf16.msra.mxu0 %v472
        %545 = vmatpush.bf16.msra.mxu0 %v470
        %546 = vmatpush.bf16.msra.mxu0 %v468
        %547 = vmatpush.bf16.msra.mxu0 %v466
        %548 = vmatpush.bf16.msra.mxu0 %v464
        %549 = vmatpush.bf16.msra.mxu0 %v462
        %550 = vmatpush.bf16.msra.mxu0 %v460
        %551 = vmatpush.bf16.msra.mxu0 %v458
        %552 = vmatmul.bf16.gmra.mxu0 %v342
        %v553 = vpop.f32.mrf.mxu0
        %v554 = vadd.f32 %v541, %v553
        %v555 = vpop.f32.mrf.mxu0
        %556 = vdwg.mxu0
        %v557 = vld [vmem:[%s4] sm:$0xff]
        %v558 = vmul.f32 %v528, %v557
        %v559 = vld [vmem:[%s5] sm:$0xff]
        %561 = vrot.lane.b32.xlu0 %v559, 48
        %v562 = vpop.permute.xlu0 %561
        %v564 = vmul.f32 %v528, %v562
        %566 = vrot.lane.b32.xlu0 %v564, 80
        %v567 = vpop.permute.xlu0 %566
        %v569 = vadd.f32 %v558, %v567
        %v570 = vld [vmem:[%s6] sm:$0xff]
        %572 = vrot.lane.b32.xlu0 %v570, 96
        %v573 = vpop.permute.xlu0 %572
        %v575 = vmul.f32 %v528, %v573
        %v576 = vld [vmem:[%s7] sm:$0xff]
        %578 = vrot.lane.b32.xlu0 %v576, 112
        %v579 = vpop.permute.xlu0 %578
        %v581 = vmul.f32 %v528, %v579
        %583 = vrot.lane.b32.xlu0 %v581, 112
        %v584 = vpop.permute.xlu0 %583
        %v586 = vadd.f32 %v575, %v584
        %v587 = vmul.f32 %v554, %v554
        %vm588 = vcmask 523264
        %v589 = vsel %vm588, %v587, 0.0
        %590 = vadd.xlane.f32.xlu0 %v589
        %v591 = vpop.xlane.xlu0 %590
        %v592 = vrcp.pop 64.0
        %v593 = vmul.f32 64.0, %v592
        %v594 = vsub.f32 1.0, %v593
        %v595 = vmul.f32 %v592, %v594
        %v596 = vadd.f32 %v592, %v595
        %vm597 = vweird.f32 %v592
        %v598 = vsel %vm597, %v592, %v596
        %v599 = vmul.f32 %v591, %v598
        %v600 = vadd.f32 %v599, 1e-06
        %v601 = vrsqrt.pop %v600
        %v602 = vmul.f32 %v601, %v600
        %v603 = vmul.f32 %v602, %v601
        %v604 = vmul.f32 0.5, %v603
        %v605 = vsub.f32 1.5, %v604
        %v606 = vmul.f32 %v601, %v605
        %vm607 = vweird.f32 %v600
        %vm608 = vweird.f32 %v601
        %vm609 = vmor %vm607, %vm608
        %v610 = vsel %vm609, %v601, %v606
        %v611 = vmul.f32 %v554, %v610
        %v612 = vpack.c.bf16 %v611, %v611
        %v613 = vld [vmem:[%s2] sm:$0xf]
        %v614 = vld [vmem:[%s2 + $0x4] sm:$0xf]
        %v615 = vld [vmem:[%s2 + $0x8] sm:$0xf]
        %v616 = vld [vmem:[%s2 + $0xc] sm:$0xf]
        %v617 = vld [vmem:[%s2 + $0x10] sm:$0xf]
        %v618 = vld [vmem:[%s2 + $0x14] sm:$0xf]
        %v619 = vld [vmem:[%s2 + $0x18] sm:$0xf]
        %v620 = vld [vmem:[%s2 + $0x1c] sm:$0xf]
        %v629 = vunpack.c.l.b16 %v613
        %v630 = vunpack.c.l.b16 %v614
        %v631 = vunpack.c.l.b16 %v615
        %v632 = vunpack.c.l.b16 %v616
        %v633 = vunpack.c.l.b16 %v617
        %v634 = vunpack.c.l.b16 %v618
        %v635 = vunpack.c.l.b16 %v619
        %v636 = vunpack.c.l.b16 %v620
        %v637 = vpack.c.b16 %v630, %v629
        %v638 = vpack.c.b16 %v632, %v631
        %v639 = vpack.c.b16 %v634, %v633
        %v640 = vpack.c.b16 %v636, %v635
        %v646 = vsel %vm588, %v612, 0
        %648 = vmatpush.bf16.msra.mxu0 0
        %649 = vmatpush.bf16.msra.mxu0 0
        %650 = vmatpush.bf16.msra.mxu0 0
        %651 = vmatpush.bf16.msra.mxu0 0
        %652 = vmatpush.bf16.msra.mxu0 %v640
        %653 = vmatpush.bf16.msra.mxu0 %v639
        %654 = vmatpush.bf16.msra.mxu0 %v638
        %655 = vmatpush.bf16.msra.mxu0 %v637
        %656 = vmatmul.bf16.gmra.mxu0 %v646
        %v657 = vpop.f32.mrf.mxu0
        %v658 = vadd.f32 0.0, %v657
        %v659 = vpop.f32.mrf.mxu0
        %660 = vdwg.mxu0
        %662 = vrot.lane.b32.xlu0 %v586, 64
        %v663 = vpop.permute.xlu0 %662
        %vm665 = vcmask 261120
        %v666 = vsel %vm665, %v658, %v663
        %v667 = vpack.c.bf16 %v569, %v569
        %v668 = vpack.c.bf16 %v666, %v666
        %vm669 = vcmask 392192
        %v671 = vsel %vm669, %v667, 0
        %v674 = vsel %vm669, %v668, 0
        %676 = vmatpush.bf16.xpose.msra.mxu0 0
        %677 = vmatpush.bf16.xpose.msra.mxu0 0
        %678 = vmatpush.bf16.xpose.msra.mxu0 0
        %679 = vmatpush.bf16.xpose.msra.mxu0 0
        %680 = vmatpush.bf16.xpose.msra.mxu0 0
        %681 = vmatpush.bf16.xpose.msra.mxu0 0
        %682 = vmatpush.bf16.xpose.msra.mxu0 0
        %683 = vmatpush.bf16.xpose.msra.mxu0 %v674
        %684 = vmatmul.bf16.gmra.mxu0 %v671
        %v685 = vpop.f32.mrf.mxu0
        %v686 = vadd.f32 0.0, %v685
        %v687 = vpop.f32.mrf.mxu0
        %688 = vdwg.mxu0
        %v689 = vlaneseq
        %v690 = vshrl.u32 %v689, 7
        %v691 = vlaneseq
        %v692 = vand.u32 %v691, 127
        %vm693 = vcmp.le.s32.totalorder %v692, %v690
        %v694 = vsel %vm693, %v686, -1e+30
        %vm695 = vcmask 64512
        %v696 = vsel %vm695, %v694, -inf
        %697 = vmax.xlane.f32.xlu0 %v696
        %v698 = vpop.xlane.xlu0 %697
        %v699 = vsub.f32 %v694, %v698
        %v700 = vmul.f32 %v699, 1.442695
        %v701 = vpow.pop %v700
        %v702 = vsel %vm695, %v701, 0.0
        %703 = vadd.xlane.f32.xlu0 %v702
        %v704 = vpop.xlane.xlu0 %703
        %v705 = vrcp.pop %v704
        %v706 = vmul.f32 %v704, %v705
        %v707 = vsub.f32 1.0, %v706
        %v708 = vmul.f32 %v705, %v707
        %v709 = vadd.f32 %v705, %v708
        %vm710 = vweird.f32 %v704
        %vm711 = vweird.f32 %v705
        %vm712 = vmor %vm710, %vm711
        %v713 = vsel %vm712, %v705, %v709
        %v714 = vand.u32 2147483647, %v704
        %vm715 = vcmp.eq.f32.partialorder %v714, 8.507059e+37
        %v716 = vand.u32 %v704, 2147483648
        %v717 = vor.u32 1.1754944e-38, %v716
        %v718 = vsel %vm715, %v717, %v713
        %v719 = vmul.f32 %v701, %v718
        %v720 = vpack.c.bf16 %v719, %v719
        %v721 = vpack.c.bf16 %v658, %v658
        %723 = vrot.lane.b32.xlu0 %v721, 96
        %v724 = vpop.permute.xlu0 %723
        %v726 = vsel %vm695, %v720, 0
        %vm728 = vcmask 1043456
        %v730 = vsel %vm728, %v724, 0
        %732 = vmatpush.bf16.msra.mxu0 0
        %733 = vmatpush.bf16.msra.mxu0 0
        %734 = vmatpush.bf16.msra.mxu0 0
        %735 = vmatpush.bf16.msra.mxu0 0
        %736 = vmatpush.bf16.msra.mxu0 0
        %737 = vmatpush.bf16.msra.mxu0 0
        %738 = vmatpush.bf16.msra.mxu0 0
        %739 = vmatpush.bf16.msra.mxu0 %v730
        %740 = vmatmul.bf16.gmra.mxu0 %v726
        %v741 = vpop.f32.mrf.mxu0
        %v742 = vadd.f32 0.0, %v741
        %v743 = vpop.f32.mrf.mxu0
        %744 = vdwg.mxu0
        %v745 = vpack.c.bf16 %v742, %v742
        %v746 = vld [vmem:[%s3] sm:$0xff]
        %v747 = vld [vmem:[%s3 + $0x8] sm:$0xff]
        %v748 = vld [vmem:[%s3 + $0x10] sm:$0xff]
        %v749 = vld [vmem:[%s3 + $0x18] sm:$0xff]
        %v754 = vunpack.c.l.b16 %v746
        %v755 = vunpack.c.h.b16 %v746
        %v756 = vunpack.c.l.b16 %v747
        %v757 = vunpack.c.h.b16 %v747
        %v758 = vunpack.c.l.b16 %v748
        %v759 = vunpack.c.h.b16 %v748
        %v760 = vunpack.c.l.b16 %v749
        %v761 = vunpack.c.h.b16 %v749
        %v762 = vpack.c.b16 %v756, %v754
        %v763 = vpack.c.b16 %v757, %v755
        %v764 = vpack.c.b16 %v760, %v758
        %v765 = vpack.c.b16 %v761, %v759
        %v771 = vsel %vm665, %v745, 0
        %773 = vmatpush.bf16.msra.mxu0 0
        %774 = vmatpush.bf16.msra.mxu0 0
        %775 = vmatpush.bf16.msra.mxu0 0
        %776 = vmatpush.bf16.msra.mxu0 0
        %777 = vmatpush.bf16.msra.mxu0 0
        %778 = vmatpush.bf16.msra.mxu0 0
        %779 = vmatpush.bf16.msra.mxu0 %v764
        %780 = vmatpush.bf16.msra.mxu0 %v762
        %781 = vmatmul.bf16.gmra.mxu0 %v771
        %v782 = vpop.f32.mrf.mxu0
        %v783 = vadd.f32 0.0, %v782
        %v784 = vpop.f32.mrf.mxu0
        %785 = vdwg.mxu0
        %786 = vmatpush.bf16.msra.mxu0 0
        %787 = vmatpush.bf16.msra.mxu0 0
        %788 = vmatpush.bf16.msra.mxu0 0
        %789 = vmatpush.bf16.msra.mxu0 0
        %790 = vmatpush.bf16.msra.mxu0 0
        %791 = vmatpush.bf16.msra.mxu0 0
        %792 = vmatpush.bf16.msra.mxu0 %v765
        %793 = vmatpush.bf16.msra.mxu0 %v763
        %794 = vmatmul.bf16.gmra.mxu0 %v771
        %v795 = vpop.f32.mrf.mxu0
        %v796 = vadd.f32 0.0, %v795
        %v797 = vpop.f32.mrf.mxu0
        %798 = vdwg.mxu0
        %v799 = vpack.c.bf16 %v796, %v783
        %800 = vst [vmem:[%s298] sm:$0xff] %v799
        %s801 = sand.u32 %s203, 1
        %s802 = scalar_lea.sflag [#allocation3], %s801
        %s803 = sand.u32 %s203, 1
        %s804 = smul.addr %s803, 8
        %s805 = scalar_lea.vmem [#allocation2], %s804
        // Predicated region
        $region53: #{mla_forward.1} parent=51 // pred_check
          %p806 = pneg %p213
        $region54: #{mla_forward.1} parent=51 // pred_check_branch
          %808 = sbr.rel (%p806) target = $region56
        $region55: #{mla_forward.1} parent=51 // pred_region
          %810 = vsyncadd %s802, 0
          %s811 = smul.addr %s22, 2
          %s812 = smul.addr %s811, 4
          %s813 = scalar_lea.hbm %s8, %s812
          %s815 = sshll.u32 %s805, 4
          %s816 = int_to_ptr.vmem [resolvable:$true] %s815
          %s817 = sshll.u32 %s813, 4
          %s818 = int_to_ptr.hbm [resolvable:$true] %s817
          %820 = dma.vmem_to_hbm [thread:$0]  %s816, 128, %s818, %s802
        $region56: #{mla_forward.1} parent=51 // pred_fallthru
          _
      $region52: #{mla_forward.1} parent=5 // pred_fallthru
        _
      %p821 = scmp.le.s32.totalorder 2, %s17
      // Predicated region
      $region57: #{mla_forward.1} parent=5 // pred_check
        %p822 = pneg %p821
      $region58: #{mla_forward.1} parent=5 // pred_check_branch
        %824 = sbr.rel (%p822) target = $region60
      $region59: #{mla_forward.1} parent=5 // pred_region
        %s825 = ssub.s32 %s17, 2
        // Predicated region
        $region61: #{mla_forward.1} parent=59 // pred_check
          %p826 = pneg %p219
        $region62: #{mla_forward.1} parent=59 // pred_check_branch
          %828 = sbr.rel (%p826) target = $region64
        $region63: #{mla_forward.1} parent=59 // pred_region
          %s829 = sand.u32 %s204, 1
          %s830 = scalar_lea.sflag [#allocation3], %s829
          %s831 = sand.u32 %s204, 1
          %s832 = smul.addr %s831, 8
          %s833 = scalar_lea.vmem [#allocation2], %s832
          %835 = dma.done %s830, 128
        $region64: #{mla_forward.1} parent=59 // pred_fallthru
          _
      $region60: #{mla_forward.1} parent=5 // pred_fallthru
        _
    $region6: #{mla_forward.1} parent=1 // loop_footer
      %s21 = sadd.s32 1, %s17
    $region7: #{mla_forward.1} parent=1 // loop_footer_branch
      %16 = sbr.rel target = $region3
    $region8: #{mla_forward.1} parent=1 // loop_exit
      _
    %836 = vsyncpa [#allocation3], 1
    %s837 = scalar_lea.sflag [#allocation3], 1
    %838 = vsyncpa %s837, 1

</llo_original>
